<compile_context>
chip_gen: v6e
topology: v6e:2x2x1
jax: 0.10.0
libtpu: 0.0.40
codegen_flags: <defaults>
</compile_context>

<pallas_src>
import functools

import jax
import jax.numpy as jnp
from jax.experimental import pallas as pl
from jax.experimental.pallas import tpu as pltpu


# --------------------------------------------------------------------------
# Kernel 1: feature projection + attention source/dest terms (hoisted)
# --------------------------------------------------------------------------
def gat_project_kernel(x_ref, w_ref, amat_ref, h_ref, alpha_ref):
    # x: [TM, Fin] bf16, w: [Fin, H*C] bf16, amat: [H*C, 2H] bf16 (block-diag)
    h = jnp.dot(x_ref[...], w_ref[...],
                preferred_element_type=jnp.float32)            # [TM, H*C] f32
    # All per-head  sum(h_head * att)  terms as a single MXU matmul.
    alpha_ref[...] = jnp.dot(h.astype(jnp.bfloat16), amat_ref[...],
                             preferred_element_type=jnp.float32)  # [TM, 2H]
    h_ref[...] = h.astype(jnp.bfloat16)


# --------------------------------------------------------------------------
# Kernel 2: per-destination-tile attention + aggregation
# --------------------------------------------------------------------------
def gat_attention_kernel(adj_ref, h_ref, asrc_ref, adst_ref, bias_ref, out_ref,
                         *, heads, out_ch, concat, apply_elu, out_dim, pad_dim):
    # adj:  [TM, Nsrc] int8 (0/1 mask, self-loops included)
    # h:    [Nsrc, H*C] bf16   (all source nodes, resident across the grid)
    # asrc: [H, Nsrc] f32      (lane-major source attention terms)
    # adst: [TM, H] f32        (destination attention terms for this tile)
    # additive mask: 0 on edges, -1e30 off edges (computed once per tile);
    # keeps the row-max exact over valid edges -> numerically robust softmax.
    attn_bias = (adj_ref[...].astype(jnp.float32) - 1.0) * jnp.float32(1e30)
    asrc = asrc_ref[...]
    adst = adst_ref[...]

    pieces = []
    acc = None
    # Only one [TM, Nsrc] temporary chain is live at a time: each head's
    # aggregation matmul is issued before the next head's logits are built.
    for hd in range(heads):
        z = adst[:, hd:hd + 1] + asrc[hd:hd + 1, :]            # [TM, Nsrc]
        e = jnp.maximum(z, 0.2 * z) + attn_bias                # LeakyReLU + mask
        m = jnp.max(e, axis=-1, keepdims=True)                 # exact valid max
        p = jnp.exp(e - m)                 # masked entries underflow to exactly 0
        denom = jnp.sum(p, axis=-1, keepdims=True)             # [TM, 1]
        # Aggregate with UN-normalized weights (saves a [TM, Nsrc] VPU multiply);
        # normalize on the small [TM, C] result instead.
        o = jnp.dot(p.astype(jnp.bfloat16),
                    h_ref[:, hd * out_ch:(hd + 1) * out_ch],
                    preferred_element_type=jnp.float32)        # [TM, C] f32
        o = o * pl.reciprocal(denom, approx=True)              # EUP reciprocal
        if concat:
            pieces.append(o)
        else:
            acc = o if acc is None else acc + o

    if concat:
        out = jnp.concatenate(pieces, axis=-1)                 # [TM, H*C]
    else:
        out = acc * jnp.float32(1.0 / heads)                   # [TM, C]

    # Pad to a lane-dense (multiple-of-128) width so the store is an unmasked vst.
    if pad_dim > out_dim:
        out = jnp.concatenate(
            [out, jnp.zeros((out.shape[0], pad_dim - out_dim), jnp.float32)],
            axis=-1)

    out = out + bias_ref[...]
    if apply_elu:
        # guarded ELU: exp only sees non-positive values
        out = jnp.where(out > 0, out, jnp.exp(jnp.minimum(out, 0.0)) - 1.0)
    out_ref[...] = out.astype(out_ref.dtype)


# --------------------------------------------------------------------------
# Host-side helpers
# --------------------------------------------------------------------------
def _build_att_mat(att_src, att_dst, heads, out_ch):
    """Block-diagonal [H*C, 2H]: col h <- att_src[h], col H+h <- att_dst[h]."""
    amat = jnp.zeros((heads * out_ch, 2 * heads), jnp.float32)
    for hd in range(heads):
        amat = amat.at[hd * out_ch:(hd + 1) * out_ch, hd].set(att_src[hd])
        amat = amat.at[hd * out_ch:(hd + 1) * out_ch, heads + hd].set(att_dst[hd])
    return amat


def _auto_tile(n_dst, n_src, hc, heads, pad_dim, budget_bytes=24 * 1024 * 1024):
    """Largest power-of-two dst tile whose per-step working set fits the budget
    (24 MiB keeps us under v7x's 32 MiB scoped-VMEM default; bigger tiles are
    only chosen when n_src is small enough)."""
    resident = n_src * hc * 2 + heads * n_src * 4       # h (bf16) + alpha_src^T (f32)
    per_row = (n_src * (1 * 2 + 4 * 3)                  # adj i8 x2 bufs + ~3 f32 temps
               + (heads + 2 * pad_dim) * 4)             # alpha_dst + out x2 bufs
    best = None
    t = 8
    while t <= min(n_dst, 1024):
        if n_dst % t == 0 and resident + t * per_row <= budget_bytes:
            best = t
        t *= 2
    return best if best is not None else n_dst          # fallback: single full block


def gat_conv(x, adj_i8, w, att_src, att_dst, bias, *, heads, out_ch, concat,
             apply_elu, out_dtype=jnp.float32, tile_m=None):
    n, fin = x.shape
    hc = heads * out_ch
    out_dim = hc if concat else out_ch
    pad_dim = max(128, ((out_dim + 127) // 128) * 128)   # lane-dense output slab

    if tile_m is not None:
        assert n % tile_m == 0, "tile_m must evenly divide the number of nodes"
        tm = tile_m
    else:
        tm = _auto_tile(n, n, hc, heads, pad_dim)
    grid = (n // tm,)

    # ---- stage 1: projection + attention terms (computed once, not per tile) ----
    x_bf = x.astype(jnp.bfloat16)
    w_bf = w.astype(jnp.bfloat16)
    amat_bf = _build_att_mat(att_src, att_dst, heads, out_ch).astype(jnp.bfloat16)

    h, alpha = pl.pallas_call(
        gat_project_kernel,
        out_shape=(jax.ShapeDtypeStruct((n, hc), jnp.bfloat16),
                   jax.ShapeDtypeStruct((n, 2 * heads), jnp.float32)),
        grid_spec=pltpu.PrefetchScalarGridSpec(
            num_scalar_prefetch=0, grid=grid,
            in_specs=[pl.BlockSpec((tm, fin), lambda i: (i, 0)),
                      pl.BlockSpec((fin, hc), lambda i: (0, 0)),
                      pl.BlockSpec((hc, 2 * heads), lambda i: (0, 0))],
            out_specs=[pl.BlockSpec((tm, hc), lambda i: (i, 0)),
                       pl.BlockSpec((tm, 2 * heads), lambda i: (i, 0))]),
        compiler_params=pltpu.CompilerParams(
            dimension_semantics=("parallel",)),
    )(x_bf, w_bf, amat_bf)

    alpha_src_t = alpha[:, :heads].T        # [H, N]  lane-major over source nodes
    alpha_dst = alpha[:, heads:]            # [N, H]
    bias_pad = jnp.pad(bias, ((0, 0), (0, pad_dim - out_dim)))

    # ---- stage 2: tiled attention + aggregation over destination blocks ----
    kernel = functools.partial(gat_attention_kernel, heads=heads, out_ch=out_ch,
                               concat=concat, apply_elu=apply_elu,
                               out_dim=out_dim, pad_dim=pad_dim)
    out_bytes = jnp.dtype(out_dtype).itemsize
    cost = pl.CostEstimate(
        flops=int(2 * heads * n * n * out_ch + 4 * heads * n * n),
        transcendentals=int(heads * n * n),
        bytes_accessed=int(n * n + n * hc * 2 + heads * n * 4
                           + n * pad_dim * out_bytes))

    out_padded = pl.pallas_call(
        kernel,
        out_shape=jax.ShapeDtypeStruct((n, pad_dim), out_dtype),
        grid_spec=pltpu.PrefetchScalarGridSpec(
            num_scalar_prefetch=0, grid=grid,
            in_specs=[pl.BlockSpec((tm, n), lambda i: (i, 0)),        # adj tile
                      pl.BlockSpec((n, hc), lambda i: (0, 0)),        # h (all src)
                      pl.BlockSpec((heads, n), lambda i: (0, 0)),     # alpha_src^T
                      pl.BlockSpec((tm, heads), lambda i: (i, 0)),    # alpha_dst
                      pl.BlockSpec((1, pad_dim), lambda i: (0, 0))],  # bias
            out_specs=pl.BlockSpec((tm, pad_dim), lambda i: (i, 0))),
        compiler_params=pltpu.CompilerParams(
            dimension_semantics=("parallel",),
            vmem_limit_bytes=48 * 1024 * 1024),
        cost_estimate=cost,
    )(adj_i8, h, alpha_src_t, alpha_dst, bias_pad)

    return out_padded[:, :out_dim]


def gat2_forward(x, adj_i8, params, tile_m=None):
    """GAT2.forward in eval mode (dropout = identity, norm=None -> no BatchNorm)."""
    # TODO(synk): dense O(N^2) adjacency; a sparse/edge-list formulation would be
    # needed to match PyG scaling on very large graphs.
    num_layers = len(params)
    for i, p in enumerate(params):
        last = (i == num_layers - 1)
        x = gat_conv(x, adj_i8,
                     p["w"], p["att_src"], p["att_dst"], p["bias"],
                     heads=p["heads"], out_ch=p["out_ch"], concat=p["concat"],
                     apply_elu=(not last),
                     # intermediate activations feed a bf16 matmul next layer,
                     # so store them in bf16 (halves writeback + next-layer read)
                     out_dtype=(jnp.float32 if last else jnp.bfloat16),
                     tile_m=tile_m)
    return x


# --------------------------------------------------------------------------
# Parameter construction (mirrors PYGGATConv glorot init, zero bias)
# --------------------------------------------------------------------------
def _glorot(key, shape):
    fan_in, fan_out = shape[0], shape[1]
    lim = jnp.sqrt(6.0 / (fan_in + fan_out))
    return jax.random.uniform(key, shape, jnp.float32, -lim, lim)


def make_params(key, num_feat, hidden, num_class, num_layers, heads, out_heads):
    params = []
    in_dim = num_feat
    for i in range(num_layers):
        last = (i == num_layers - 1)
        h = out_heads if last else heads
        c = num_class if last else hidden
        concat = (not last) and (num_layers > 1)
        out_dim = h * c if concat else c
        key, k1, k2, k3 = jax.random.split(key, 4)
        params.append({
            "w": _glorot(k1, (in_dim, h * c)),
            "att_src": _glorot(k2, (h, c)),
            "att_dst": _glorot(k3, (h, c)),
            "bias": jnp.zeros((1, out_dim), jnp.float32),
            "heads": h, "out_ch": c, "concat": concat,
        })
        in_dim = out_dim
    return params


if __name__ == "__main__":
    # Small synthetic graph consistent with GAT2(num_feat, hidden, 2 layers, num_class)
    N, E = 256, 1024
    num_feat, hidden, num_class = 32, 32, 8
    num_layers, heads, out_heads = 2, 2, 1

    key = jax.random.PRNGKey(0)
    kx, ksrc, kdst, kp = jax.random.split(key, 4)

    x = jax.random.normal(kx, (N, num_feat), jnp.float32)

    # edge_index: source j -> destination i; add self-loops (PyG add_self_loops=True)
    src = jax.random.randint(ksrc, (E,), 0, N)
    dst = jax.random.randint(kdst, (E,), 0, N)
    adj = jnp.zeros((N, N), jnp.float32).at[dst, src].set(1.0)
    adj = jnp.maximum(adj, jnp.eye(N, dtype=jnp.float32))
    adj_i8 = adj.astype(jnp.int8)          # adjacency is only a mask -> ship as int8

    params = make_params(kp, num_feat, hidden, num_class, num_layers,
                         heads, out_heads)

    # tile_m=128 -> grid=(2,) per layer, exercising the tiled/pipelined path.
    out = gat2_forward(x, adj_i8, params, tile_m=128)
    jax.block_until_ready(out)
    assert out.shape == (N, num_class)
    assert bool(jnp.all(jnp.isfinite(out)))
    print("KERNEL_OK")
</pallas_src>

<mosaic_0001>
module attributes {stable_mosaic.version = 11 : i64} {
  func.func @gat_project_kernel(%arg0: i32, %arg1: memref<128x32xbf16, #tpu.memory_space<vmem>>, %arg2: memref<32x64xbf16, #tpu.memory_space<vmem>>, %arg3: memref<64x4xbf16, #tpu.memory_space<vmem>>, %arg4: memref<128x64xbf16, #tpu.memory_space<vmem>>, %arg5: memref<128x4xf32, #tpu.memory_space<vmem>>) attributes {dimension_semantics = [#tpu.dimension_semantics<parallel>], iteration_bounds = array<i64: 2>, scalar_prefetch = 0 : i64, scratch_operands = 0 : i64, tpu.core_type = #tpu.core_type<tc>, window_params = [{transform_indices = @transform_0, window_bounds = array<i64: 128, 32>}, {pipeline_mode = #tpu.pipeline_mode<synchronous>, transform_indices = @transform_1, window_bounds = array<i64: 32, 64>}, {pipeline_mode = #tpu.pipeline_mode<synchronous>, transform_indices = @transform_2, window_bounds = array<i64: 64, 4>}, {transform_indices = @transform_3, window_bounds = array<i64: 128, 64>}, {transform_indices = @transform_4, window_bounds = array<i64: 128, 4>}]} {
    %c0 = arith.constant 0 : index
    %c0_0 = arith.constant 0 : index
    %0 = vector.load %arg1[%c0, %c0_0] : memref<128x32xbf16, #tpu.memory_space<vmem>>, vector<128x32xbf16>
    %c0_1 = arith.constant 0 : index
    %c0_2 = arith.constant 0 : index
    %1 = vector.load %arg2[%c0_1, %c0_2] : memref<32x64xbf16, #tpu.memory_space<vmem>>, vector<32x64xbf16>
    %cst = arith.constant dense<0.000000e+00> : vector<128x64xf32>
    %2 = tpu.matmul %0, %1, %cst {dimension_numbers = #tpu.dot_dimension_numbers<[1], [0], [0], [1], [0, 0, 1, 1], [], []>} : vector<128x32xbf16>, vector<32x64xbf16>, vector<128x64xf32> -> vector<128x64xf32>
    %3 = arith.truncf %2 : vector<128x64xf32> to vector<128x64xbf16>
    %c0_3 = arith.constant 0 : index
    %c0_4 = arith.constant 0 : index
    %4 = vector.load %arg3[%c0_3, %c0_4] : memref<64x4xbf16, #tpu.memory_space<vmem>>, vector<64x4xbf16>
    %cst_5 = arith.constant dense<0.000000e+00> : vector<128x4xf32>
    %5 = tpu.matmul %3, %4, %cst_5 {dimension_numbers = #tpu.dot_dimension_numbers<[1], [0], [0], [1], [0, 0, 1, 1], [], []>} : vector<128x64xbf16>, vector<64x4xbf16>, vector<128x4xf32> -> vector<128x4xf32>
    %c0_6 = arith.constant 0 : index
    %c0_7 = arith.constant 0 : index
    %6 = vector.load %arg5[%c0_6, %c0_7] : memref<128x4xf32, #tpu.memory_space<vmem>>, vector<128x4xf32>
    tpu.vector_store %arg5[%c0_6, %c0_7], %5 {strides = array<i32>} : memref<128x4xf32, #tpu.memory_space<vmem>>, vector<128x4xf32>,
    %7 = arith.truncf %2 : vector<128x64xf32> to vector<128x64xbf16>
    %c0_8 = arith.constant 0 : index
    %c0_9 = arith.constant 0 : index
    %8 = vector.load %arg4[%c0_8, %c0_9] : memref<128x64xbf16, #tpu.memory_space<vmem>>, vector<128x64xbf16>
    tpu.vector_store %arg4[%c0_8, %c0_9], %7 {strides = array<i32>} : memref<128x64xbf16, #tpu.memory_space<vmem>>, vector<128x64xbf16>,
    return
  }
  func.func @transform_0(%arg0: i32) -> (i32, i32) {
    %c0_i32 = arith.constant 0 : i32
    %c0_i32_0 = arith.constant 0 : i32
    return %arg0, %c0_i32 : i32, i32
  }
  func.func @transform_1(%arg0: i32) -> (i32, i32) {
    %c0_i32 = arith.constant 0 : i32
    %c0_i32_0 = arith.constant 0 : i32
    %c0_i32_1 = arith.constant 0 : i32
    return %c0_i32, %c0_i32_0 : i32, i32
  }
  func.func @transform_2(%arg0: i32) -> (i32, i32) {
    %c0_i32 = arith.constant 0 : i32
    %c0_i32_0 = arith.constant 0 : i32
    %c0_i32_1 = arith.constant 0 : i32
    return %c0_i32, %c0_i32_0 : i32, i32
  }
  func.func @transform_3(%arg0: i32) -> (i32, i32) {
    %c0_i32 = arith.constant 0 : i32
    %c0_i32_0 = arith.constant 0 : i32
    return %arg0, %c0_i32 : i32, i32
  }
  func.func @transform_4(%arg0: i32) -> (i32, i32) {
    %c0_i32 = arith.constant 0 : i32
    %c0_i32_0 = arith.constant 0 : i32
    return %arg0, %c0_i32 : i32, i32
  }
}

</mosaic_0001>

<llo_original>
// kernel: tpu_custom_call.1
$region0: #{tpu_custom_call.1}
  #allocation0 [shape = 'u32[]', space=smem, size = 0x4, offset = 0x4, fixed_abs, tag = 'smem constant byte address 0x4 - core index']
  #allocation1 [shape = 'u32[144,128]{1,0:T(1,128)}', space=vmem, size = 0x12000, scoped, tag = 'internal scratch']
  %s0 = inlined_call_operand.vmem [shape: bf16[256,32], index: 0, kind: input, shape index: {}]
  %s1 = inlined_call_operand.vmem [shape: bf16[32,64], index: 1, kind: input, shape index: {}]
  %s2 = inlined_call_operand.vmem [shape: bf16[64,4], index: 2, kind: input, shape index: {}]
  %s3 = inlined_call_operand.vmem [shape: bf16[256,64], index: 3, kind: output, shape index: {0}]
  %s4 = inlined_call_operand.vmem [shape: f32[256,4], index: 4, kind: output, shape index: {1}]
  %5 = xla_tuple %s3, %s4
  %s6 = sld [smem:[#allocation0]]
  $region53: #{tpu_custom_call.1} parent=0
    _
  %s8 = ssub.s32 1, %s6
  %s9 = scalar_select 0, %s8, %s6
  loop: start=0, step=1, limit=4
  $region2: #{tpu_custom_call.1} parent=0 // loop_pre_header
    _
  $region3: #{tpu_custom_call.1} parent=0 // loop_header
    %s11 = sphi 0, %s15
    %p12 = scmp.ge.s32.totalorder %s11, 4
    %s21 = sphi 0, %s23
    %s24 = sphi 0, %s21
    %s25 = sphi 0, %s24
    %s41 = sphi 0, %s25
    %s45 = sphi 0, %s45
    %s47 = sphi 0, %s45
    %s48 = sphi 0, %s47
    %s62 = sphi 0, %s48
    %s66 = sphi 0, %s66
    %s68 = sphi 0, %s66
    %s69 = sphi 0, %s68
    %s83 = sphi 0, %s69
    %s89 = sphi 0, %s91
    %s92 = sphi 0, %s89
    %s93 = sphi 0, %s92
    %s109 = sphi 0, %s93
    %s115 = sphi 0, %s117
    %s118 = sphi 0, %s115
    %s119 = sphi 0, %s118
    %s135 = sphi 0, %s119
  $region4: #{tpu_custom_call.1} parent=0 // loop_header_branch
    %14 = sbr.rel (%p12) target = $region8
  $region5: #{tpu_custom_call.1} parent=0 // loop_body
    %s16 = ssub.s32 %s11, 1
    %s17 = ssub.s32 %s11, 2
    %s18 = sadd.s32 %s11, 1
    %s19 = ssub.s32 %s11, %s18
    %p20 = scmp.eq.s32.totalorder %s19, 0
    %s22 = sadd.s32 %s21, 1
    %s23 = scalar_select %p20, %s21, %s22
    %p26 = pneg %p20
    %p27 = scmp.eq.s32.totalorder %s11, 1
    %p28 = por %p26, %p27
    %p29 = scmp.ne.s32.totalorder %s21, %s24
    %p30 = scmp.eq.s32.totalorder %s11, 0
    %p31 = por %p29, %p30
    %p32 = scmp.ne.s32.totalorder %s21, %s24
    %p33 = scmp.eq.s32.totalorder %s16, 1
    %p34 = por %p32, %p33
    %p35 = scmp.ne.s32.totalorder %s24, %s25
    %p36 = scmp.eq.s32.totalorder %s16, 0
    %p37 = por %p35, %p36
    %p38 = scmp.ne.s32.totalorder %s24, %s25
    %p39 = scmp.eq.s32.totalorder %s17, 1
    %p40 = por %p38, %p39
    %p42 = scmp.ne.s32.totalorder %s25, %s41
    %p43 = scmp.eq.s32.totalorder %s17, 0
    %p44 = por %p42, %p43
    %s46 = sadd.s32 %s45, 1
    %p49 = scmp.eq.s32.totalorder %s11, 1
    %p50 = scmp.ne.s32.totalorder %s45, %s47
    %p51 = scmp.eq.s32.totalorder %s11, 0
    %p52 = por %p50, %p51
    %p53 = scmp.ne.s32.totalorder %s45, %s47
    %p54 = scmp.eq.s32.totalorder %s16, 1
    %p55 = por %p53, %p54
    %p56 = scmp.ne.s32.totalorder %s47, %s48
    %p57 = scmp.eq.s32.totalorder %s16, 0
    %p58 = por %p56, %p57
    %p59 = scmp.ne.s32.totalorder %s47, %s48
    %p60 = scmp.eq.s32.totalorder %s17, 1
    %p61 = por %p59, %p60
    %p63 = scmp.ne.s32.totalorder %s48, %s62
    %p64 = scmp.eq.s32.totalorder %s17, 0
    %p65 = por %p63, %p64
    %s67 = sadd.s32 %s66, 1
    %p70 = scmp.eq.s32.totalorder %s11, 1
    %p71 = scmp.ne.s32.totalorder %s66, %s68
    %p72 = scmp.eq.s32.totalorder %s11, 0
    %p73 = por %p71, %p72
    %p74 = scmp.ne.s32.totalorder %s66, %s68
    %p75 = scmp.eq.s32.totalorder %s16, 1
    %p76 = por %p74, %p75
    %p77 = scmp.ne.s32.totalorder %s68, %s69
    %p78 = scmp.eq.s32.totalorder %s16, 0
    %p79 = por %p77, %p78
    %p80 = scmp.ne.s32.totalorder %s68, %s69
    %p81 = scmp.eq.s32.totalorder %s17, 1
    %p82 = por %p80, %p81
    %p84 = scmp.ne.s32.totalorder %s69, %s83
    %p85 = scmp.eq.s32.totalorder %s17, 0
    %p86 = por %p84, %p85
    %s87 = ssub.s32 %s11, %s18
    %p88 = scmp.eq.s32.totalorder %s87, 0
    %s90 = sadd.s32 %s89, 1
    %s91 = scalar_select %p88, %s89, %s90
    %p94 = pneg %p88
    %p95 = scmp.eq.s32.totalorder %s11, 1
    %p96 = por %p94, %p95
    %p97 = scmp.ne.s32.totalorder %s89, %s92
    %p98 = scmp.eq.s32.totalorder %s11, 0
    %p99 = por %p97, %p98
    %p100 = scmp.ne.s32.totalorder %s89, %s92
    %p101 = scmp.eq.s32.totalorder %s16, 1
    %p102 = por %p100, %p101
    %p103 = scmp.ne.s32.totalorder %s92, %s93
    %p104 = scmp.eq.s32.totalorder %s16, 0
    %p105 = por %p103, %p104
    %p106 = scmp.ne.s32.totalorder %s92, %s93
    %p107 = scmp.eq.s32.totalorder %s17, 1
    %p108 = por %p106, %p107
    %p110 = scmp.ne.s32.totalorder %s93, %s109
    %p111 = scmp.eq.s32.totalorder %s17, 0
    %p112 = por %p110, %p111
    %s113 = ssub.s32 %s11, %s18
    %p114 = scmp.eq.s32.totalorder %s113, 0
    %s116 = sadd.s32 %s115, 1
    %s117 = scalar_select %p114, %s115, %s116
    %p120 = pneg %p114
    %p121 = scmp.eq.s32.totalorder %s11, 1
    %p122 = por %p120, %p121
    %p123 = scmp.ne.s32.totalorder %s115, %s118
    %p124 = scmp.eq.s32.totalorder %s11, 0
    %p125 = por %p123, %p124
    %p126 = scmp.ne.s32.totalorder %s115, %s118
    %p127 = scmp.eq.s32.totalorder %s16, 1
    %p128 = por %p126, %p127
    %p129 = scmp.ne.s32.totalorder %s118, %s119
    %p130 = scmp.eq.s32.totalorder %s16, 0
    %p131 = por %p129, %p130
    %p132 = scmp.ne.s32.totalorder %s118, %s119
    %p133 = scmp.eq.s32.totalorder %s17, 1
    %p134 = por %p132, %p133
    %p136 = scmp.ne.s32.totalorder %s119, %s135
    %p137 = scmp.eq.s32.totalorder %s17, 0
    %p138 = por %p136, %p137
    %p139 = scmp.le.s32.totalorder 1, %s11
    %p140 = scmp.lt.s32.totalorder %s11, 3
    %p141 = pnand %p139, %p140
    %p142 = pneg %p141
    // Predicated region
    $region9: #{tpu_custom_call.1} parent=5 // pred_check
      _
    $region10: #{tpu_custom_call.1} parent=5 // pred_check_branch
      %144 = sbr.rel (%p141) target = $region12
    $region11: #{tpu_custom_call.1} parent=5 // pred_region
      %s145 = ssub.s32 %s11, 1
      // Predicated region
      $region13: #{tpu_custom_call.1} parent=11 // pred_check
        %p146 = pneg %p58
      $region14: #{tpu_custom_call.1} parent=11 // pred_check_branch
        %148 = sbr.rel (%p146) target = $region16
      $region15: #{tpu_custom_call.1} parent=11 // pred_region
        _
      $region16: #{tpu_custom_call.1} parent=11 // pred_fallthru
        _
      // Predicated region
      $region17: #{tpu_custom_call.1} parent=11 // pred_check
        %p149 = pneg %p79
      $region18: #{tpu_custom_call.1} parent=11 // pred_check_branch
        %151 = sbr.rel (%p149) target = $region20
      $region19: #{tpu_custom_call.1} parent=11 // pred_region
        _
      $region20: #{tpu_custom_call.1} parent=11 // pred_fallthru
        _
    $region12: #{tpu_custom_call.1} parent=5 // pred_fallthru
      _
    %p152 = scmp.lt.s32.totalorder %s11, 2
    // Predicated region
    $region21: #{tpu_custom_call.1} parent=5 // pred_check
      %p153 = pneg %p152
    $region22: #{tpu_custom_call.1} parent=5 // pred_check_branch
      %155 = sbr.rel (%p153) target = $region24
    $region23: #{tpu_custom_call.1} parent=5 // pred_region
      // Predicated region
      $region25: #{tpu_custom_call.1} parent=23 // pred_check
        %p156 = pneg %p31
      $region26: #{tpu_custom_call.1} parent=23 // pred_check_branch
        %158 = sbr.rel (%p156) target = $region28
      $region27: #{tpu_custom_call.1} parent=23 // pred_region
        %s159 = smul.u32 16, %s11
        %p160 = scmp.lt.s32.totalorder %s159, 31
        %s161 = scalar_select %p160, %s159, 31
        %s162 = smul.addr %s161, 4
        %s163 = scalar_lea.vmem %s0, %s162
        %s164 = smul.u32 16, %s11
      $region28: #{tpu_custom_call.1} parent=23 // pred_fallthru
        _
    $region24: #{tpu_custom_call.1} parent=5 // pred_fallthru
      _
    %p165 = scmp.le.s32.totalorder 1, %s11
    %p166 = scmp.lt.s32.totalorder %s11, 3
    %p167 = pnand %p165, %p166
    %p168 = pneg %p167
    // Predicated region
    $region29: #{tpu_custom_call.1} parent=5 // pred_check
      _
    $region30: #{tpu_custom_call.1} parent=5 // pred_check_branch
      %170 = sbr.rel (%p167) target = $region32
    $region31: #{tpu_custom_call.1} parent=5 // pred_region
      %s171 = ssub.s32 %s11, 1
      %s172 = smul.u32 16, %s16
      %p173 = scmp.lt.s32.totalorder %s172, 31
      %s174 = scalar_select %p173, %s172, 31
      %s175 = smul.addr %s174, 4
      %s176 = scalar_lea.vmem %s0, %s175
      %p177 = pneg %p37
      %p178 = pneg %p34
      %p179 = pneg %p58
      %p180 = pneg %p55
      %p181 = pneg %p79
      %p182 = pneg %p76
      %p183 = pneg %p105
      %p184 = pneg %p102
      %s185 = smul.u32 16, %s16
      %p186 = scmp.lt.s32.totalorder %s185, 31
      %s187 = scalar_select %p186, %s185, 31
      %s188 = smul.addr %s187, 4
      %s189 = scalar_lea.vmem %s3, %s188
      %p190 = pneg %p131
      %p191 = pneg %p128
      %s192 = smul.u32 16, %s16
      %p193 = scmp.lt.s32.totalorder %s192, 31
      %s194 = scalar_select %p193, %s192, 31
      %s195 = smul.addr %s194, 8
      %s196 = scalar_lea.vmem %s4, %s195
      %s197 = smul.u32 16, %s16
      %p198 = scmp.lt.s32.totalorder %s197, 31
      %s199 = scalar_select %p198, %s197, 31
      %s200 = smul.addr %s199, 4
      %s201 = scalar_lea.vmem %s0, %s200
      %s202 = smul.u32 16, %s16
      %s203 = smul.u32 16, %s16
      %p204 = scmp.lt.s32.totalorder %s203, 31
      %s205 = scalar_select %p204, %s203, 31
      %s206 = smul.addr %s205, 4
      %s207 = scalar_lea.vmem %s3, %s206
      %s208 = smul.u32 16, %s16
      %s209 = smul.u32 16, %s16
      %p210 = scmp.lt.s32.totalorder %s209, 31
      %s211 = scalar_select %p210, %s209, 31
      %s212 = smul.addr %s211, 8
      %s213 = scalar_lea.vmem %s4, %s212
      %s214 = smul.u32 16, %s16
      %v216 = vld [vmem:[%s201] sm:$0xf]
      %v217 = vld [vmem:[%s201 + $0x4] sm:$0xf]
      %v218 = vld [vmem:[%s201 + $0x8] sm:$0xf]
      %v219 = vld [vmem:[%s201 + $0xc] sm:$0xf]
      %v220 = vld [vmem:[%s201 + $0x10] sm:$0xf]
      %v221 = vld [vmem:[%s201 + $0x14] sm:$0xf]
      %v222 = vld [vmem:[%s201 + $0x18] sm:$0xf]
      %v223 = vld [vmem:[%s201 + $0x1c] sm:$0xf]
      %v224 = vld [vmem:[%s201 + $0x20] sm:$0xf]
      %v225 = vld [vmem:[%s201 + $0x24] sm:$0xf]
      %v226 = vld [vmem:[%s201 + $0x28] sm:$0xf]
      %v227 = vld [vmem:[%s201 + $0x2c] sm:$0xf]
      %v228 = vld [vmem:[%s201 + $0x30] sm:$0xf]
      %v229 = vld [vmem:[%s201 + $0x34] sm:$0xf]
      %v230 = vld [vmem:[%s201 + $0x38] sm:$0xf]
      %v231 = vld [vmem:[%s201 + $0x3c] sm:$0xf]
      %v232 = vld [vmem:[%s1] sm:$0xf]
      %v233 = vld [vmem:[%s1 + $0x4] sm:$0xf]
      %v234 = vld [vmem:[%s1 + $0x8] sm:$0xf]
      %v235 = vld [vmem:[%s1 + $0xc] sm:$0xf]
      %v252 = vunpack.c.l.b16 %v216
      %v253 = vunpack.c.l.b16 %v217
      %v254 = vunpack.c.l.b16 %v218
      %v255 = vunpack.c.l.b16 %v219
      %v256 = vunpack.c.l.b16 %v220
      %v257 = vunpack.c.l.b16 %v221
      %v258 = vunpack.c.l.b16 %v222
      %v259 = vunpack.c.l.b16 %v223
      %v260 = vunpack.c.l.b16 %v224
      %v261 = vunpack.c.l.b16 %v225
      %v262 = vunpack.c.l.b16 %v226
      %v263 = vunpack.c.l.b16 %v227
      %v264 = vunpack.c.l.b16 %v228
      %v265 = vunpack.c.l.b16 %v229
      %v266 = vunpack.c.l.b16 %v230
      %v267 = vunpack.c.l.b16 %v231
      %v268 = vpack.c.b16 %v253, %v252
      %v269 = vpack.c.b16 %v255, %v254
      %v270 = vpack.c.b16 %v257, %v256
      %v271 = vpack.c.b16 %v259, %v258
      %v272 = vpack.c.b16 %v261, %v260
      %v273 = vpack.c.b16 %v263, %v262
      %v274 = vpack.c.b16 %v265, %v264
      %v275 = vpack.c.b16 %v267, %v266
      %v280 = vunpack.c.l.b16 %v232
      %v281 = vunpack.c.l.b16 %v233
      %v282 = vunpack.c.l.b16 %v234
      %v283 = vunpack.c.l.b16 %v235
      %v284 = vpack.c.b16 %v281, %v280
      %v285 = vpack.c.b16 %v283, %v282
      %vm288 = vcmask 261120
      %v290 = vsel %vm288, %v268, 0
      %v293 = vsel %vm288, %v269, 0
      %v296 = vsel %vm288, %v270, 0
      %v299 = vsel %vm288, %v271, 0
      %v302 = vsel %vm288, %v272, 0
      %v305 = vsel %vm288, %v273, 0
      %v308 = vsel %vm288, %v274, 0
      %v311 = vsel %vm288, %v275, 0
      %313 = vmatprep.subr.bf16.mxu0 0
      %314 = vmatpush1.bf16.msra.mxu0 0
      %315 = vmatprep.subr.bf16.mxu0 0
      %316 = vmatpush1.bf16.msra.mxu0 0
      %317 = vmatprep.subr.bf16.mxu0 0
      %318 = vmatpush1.bf16.msra.mxu0 0
      %319 = vmatprep.subr.bf16.mxu0 0
      %320 = vmatpush1.bf16.msra.mxu0 0
      %321 = vmatprep.subr.bf16.mxu0 0
      %322 = vmatpush1.bf16.msra.mxu0 0
      %323 = vmatprep.subr.bf16.mxu0 0
      %324 = vmatpush1.bf16.msra.mxu0 0
      %325 = vmatprep.subr.bf16.mxu0 0
      %326 = vmatpush1.bf16.msra.mxu0 %v285
      %327 = vmatprep.subr.bf16.mxu0 0
      %328 = vmatpush1.bf16.msra.mxu0 %v284
      %329 = vmatprep.subr.bf16.mxu0 0
      %330 = vmatpush2.bf16.msra.mxu0 0
      %331 = vmatprep.subr.bf16.mxu0 0
      %332 = vmatpush2.bf16.msra.mxu0 0
      %333 = vmatprep.subr.bf16.mxu0 0
      %334 = vmatpush2.bf16.msra.mxu0 0
      %335 = vmatprep.subr.bf16.mxu0 0
      %336 = vmatpush2.bf16.msra.mxu0 0
      %337 = vmatprep.subr.bf16.mxu0 0
      %338 = vmatpush2.bf16.msra.mxu0 0
      %339 = vmatprep.subr.bf16.mxu0 0
      %340 = vmatpush2.bf16.msra.mxu0 0
      %341 = vmatprep.subr.bf16.mxu0 0
      %342 = vmatpush2.bf16.msra.mxu0 0
      %343 = vmatprep.subr.bf16.mxu0 0
      %344 = vmatpush2.bf16.msra.mxu0 0
      %345 = vmatprep.mubr.bf16.mxu0 0
      %346 = vmatmul.mubr.bf16.gmra.mxu0 %v290
      %v347 = vpop.f32.mrf.mxu0
      %v348 = vadd.f32 0.0, %v347
      %v349 = vpop.f32.mrf.mxu0
      %v350 = vpop.f32.mrf.mxu0
      %v351 = vadd.f32 0.0, %v350
      %v352 = vpop.f32.mrf.mxu0
      %353 = vmatprep.mubr.bf16.mxu0 0
      %354 = vmatmul.mubr.bf16.gmra.mxu0 %v293
      %v355 = vpop.f32.mrf.mxu0
      %v356 = vadd.f32 0.0, %v355
      %v357 = vpop.f32.mrf.mxu0
      %v358 = vpop.f32.mrf.mxu0
      %v359 = vadd.f32 0.0, %v358
      %v360 = vpop.f32.mrf.mxu0
      %361 = vmatprep.mubr.bf16.mxu0 0
      %362 = vmatmul.mubr.bf16.gmra.mxu0 %v296
      %v363 = vpop.f32.mrf.mxu0
      %v364 = vadd.f32 0.0, %v363
      %v365 = vpop.f32.mrf.mxu0
      %v366 = vpop.f32.mrf.mxu0
      %v367 = vadd.f32 0.0, %v366
      %v368 = vpop.f32.mrf.mxu0
      %369 = vmatprep.mubr.bf16.mxu0 0
      %370 = vmatmul.mubr.bf16.gmra.mxu0 %v299
      %v371 = vpop.f32.mrf.mxu0
      %v372 = vadd.f32 0.0, %v371
      %v373 = vpop.f32.mrf.mxu0
      %v374 = vpop.f32.mrf.mxu0
      %v375 = vadd.f32 0.0, %v374
      %v376 = vpop.f32.mrf.mxu0
      %377 = vmatprep.mubr.bf16.mxu0 0
      %378 = vmatmul.mubr.bf16.gmra.mxu0 %v302
      %v379 = vpop.f32.mrf.mxu0
      %v380 = vadd.f32 0.0, %v379
      %v381 = vpop.f32.mrf.mxu0
      %v382 = vpop.f32.mrf.mxu0
      %v383 = vadd.f32 0.0, %v382
      %v384 = vpop.f32.mrf.mxu0
      %385 = vmatprep.mubr.bf16.mxu0 0
      %386 = vmatmul.mubr.bf16.gmra.mxu0 %v305
      %v387 = vpop.f32.mrf.mxu0
      %v388 = vadd.f32 0.0, %v387
      %v389 = vpop.f32.mrf.mxu0
      %v390 = vpop.f32.mrf.mxu0
      %v391 = vadd.f32 0.0, %v390
      %v392 = vpop.f32.mrf.mxu0
      %393 = vmatprep.mubr.bf16.mxu0 0
      %394 = vmatmul.mubr.bf16.gmra.mxu0 %v308
      %v395 = vpop.f32.mrf.mxu0
      %v396 = vadd.f32 0.0, %v395
      %v397 = vpop.f32.mrf.mxu0
      %v398 = vpop.f32.mrf.mxu0
      %v399 = vadd.f32 0.0, %v398
      %v400 = vpop.f32.mrf.mxu0
      %401 = vmatprep.mubr.bf16.mxu0 0
      %402 = vmatmul.mubr.bf16.gmra.mxu0 %v311
      %v403 = vpop.f32.mrf.mxu0
      %v404 = vadd.f32 0.0, %v403
      %v405 = vpop.f32.mrf.mxu0
      %v406 = vpop.f32.mrf.mxu0
      %v407 = vadd.f32 0.0, %v406
      %v408 = vpop.f32.mrf.mxu0
      %409 = vdwg.mxu0
      %v410 = vpack.c.bf16 %v351, %v348
      %v411 = vpack.c.bf16 %v359, %v356
      %v412 = vpack.c.bf16 %v367, %v364
      %v413 = vpack.c.bf16 %v375, %v372
      %v414 = vpack.c.bf16 %v383, %v380
      %v415 = vpack.c.bf16 %v391, %v388
      %v416 = vpack.c.bf16 %v399, %v396
      %v417 = vpack.c.bf16 %v407, %v404
      %v418 = vld [vmem:[%s2] sm:$0xf]
      %v419 = vld [vmem:[%s2 + $0x4] sm:$0xf]
      %v420 = vld [vmem:[%s2 + $0x8] sm:$0xf]
      %v421 = vld [vmem:[%s2 + $0xc] sm:$0xf]
      %v422 = vld [vmem:[%s2 + $0x10] sm:$0xf]
      %v423 = vld [vmem:[%s2 + $0x14] sm:$0xf]
      %v424 = vld [vmem:[%s2 + $0x18] sm:$0xf]
      %v425 = vld [vmem:[%s2 + $0x1c] sm:$0xf]
      %v434 = vunpack.c.l.b16 %v418
      %v435 = vunpack.c.l.b16 %v419
      %v436 = vunpack.c.l.b16 %v420
      %v437 = vunpack.c.l.b16 %v421
      %v438 = vunpack.c.l.b16 %v422
      %v439 = vunpack.c.l.b16 %v423
      %v440 = vunpack.c.l.b16 %v424
      %v441 = vunpack.c.l.b16 %v425
      %v442 = vpack.c.b16 %v435, %v434
      %v443 = vpack.c.b16 %v437, %v436
      %v444 = vpack.c.b16 %v439, %v438
      %v445 = vpack.c.b16 %v441, %v440
      %vm450 = vcmask 523264
      %v452 = vsel %vm450, %v410, 0
      %v455 = vsel %vm450, %v411, 0
      %v458 = vsel %vm450, %v412, 0
      %v461 = vsel %vm450, %v413, 0
      %v464 = vsel %vm450, %v414, 0
      %v467 = vsel %vm450, %v415, 0
      %v470 = vsel %vm450, %v416, 0
      %v473 = vsel %vm450, %v417, 0
      %475 = vmatprep.subr.bf16.mxu0 0
      %476 = vmatpush1.bf16.msra.mxu0 0
      %477 = vmatprep.subr.bf16.mxu0 0
      %478 = vmatpush1.bf16.msra.mxu0 0
      %479 = vmatprep.subr.bf16.mxu0 0
      %480 = vmatpush1.bf16.msra.mxu0 0
      %481 = vmatprep.subr.bf16.mxu0 0
      %482 = vmatpush1.bf16.msra.mxu0 0
      %483 = vmatprep.subr.bf16.mxu0 0
      %484 = vmatpush1.bf16.msra.mxu0 %v445
      %485 = vmatprep.subr.bf16.mxu0 0
      %486 = vmatpush1.bf16.msra.mxu0 %v444
      %487 = vmatprep.subr.bf16.mxu0 0
      %488 = vmatpush1.bf16.msra.mxu0 %v443
      %489 = vmatprep.subr.bf16.mxu0 0
      %490 = vmatpush1.bf16.msra.mxu0 %v442
      %491 = vmatprep.subr.bf16.mxu0 0
      %492 = vmatpush2.bf16.msra.mxu0 0
      %493 = vmatprep.subr.bf16.mxu0 0
      %494 = vmatpush2.bf16.msra.mxu0 0
      %495 = vmatprep.subr.bf16.mxu0 0
      %496 = vmatpush2.bf16.msra.mxu0 0
      %497 = vmatprep.subr.bf16.mxu0 0
      %498 = vmatpush2.bf16.msra.mxu0 0
      %499 = vmatprep.subr.bf16.mxu0 0
      %500 = vmatpush2.bf16.msra.mxu0 0
      %501 = vmatprep.subr.bf16.mxu0 0
      %502 = vmatpush2.bf16.msra.mxu0 0
      %503 = vmatprep.subr.bf16.mxu0 0
      %504 = vmatpush2.bf16.msra.mxu0 0
      %505 = vmatprep.subr.bf16.mxu0 0
      %506 = vmatpush2.bf16.msra.mxu0 0
      %507 = vmatprep.mubr.bf16.mxu0 0
      %508 = vmatmul.mubr.bf16.gmra.mxu0 %v452
      %v509 = vpop.f32.mrf.mxu0
      %v510 = vadd.f32 0.0, %v509
      %v511 = vpop.f32.mrf.mxu0
      %v512 = vpop.f32.mrf.mxu0
      %v513 = vadd.f32 0.0, %v512
      %v514 = vpop.f32.mrf.mxu0
      %515 = vmatprep.mubr.bf16.mxu0 0
      %516 = vmatmul.mubr.bf16.gmra.mxu0 %v455
      %v517 = vpop.f32.mrf.mxu0
      %v518 = vadd.f32 0.0, %v517
      %v519 = vpop.f32.mrf.mxu0
      %v520 = vpop.f32.mrf.mxu0
      %v521 = vadd.f32 0.0, %v520
      %v522 = vpop.f32.mrf.mxu0
      %523 = vmatprep.mubr.bf16.mxu0 0
      %524 = vmatmul.mubr.bf16.gmra.mxu0 %v458
      %v525 = vpop.f32.mrf.mxu0
      %v526 = vadd.f32 0.0, %v525
      %v527 = vpop.f32.mrf.mxu0
      %v528 = vpop.f32.mrf.mxu0
      %v529 = vadd.f32 0.0, %v528
      %v530 = vpop.f32.mrf.mxu0
      %531 = vmatprep.mubr.bf16.mxu0 0
      %532 = vmatmul.mubr.bf16.gmra.mxu0 %v461
      %v533 = vpop.f32.mrf.mxu0
      %v534 = vadd.f32 0.0, %v533
      %v535 = vpop.f32.mrf.mxu0
      %v536 = vpop.f32.mrf.mxu0
      %v537 = vadd.f32 0.0, %v536
      %v538 = vpop.f32.mrf.mxu0
      %539 = vmatprep.mubr.bf16.mxu0 0
      %540 = vmatmul.mubr.bf16.gmra.mxu0 %v464
      %v541 = vpop.f32.mrf.mxu0
      %v542 = vadd.f32 0.0, %v541
      %v543 = vpop.f32.mrf.mxu0
      %v544 = vpop.f32.mrf.mxu0
      %v545 = vadd.f32 0.0, %v544
      %v546 = vpop.f32.mrf.mxu0
      %547 = vmatprep.mubr.bf16.mxu0 0
      %548 = vmatmul.mubr.bf16.gmra.mxu0 %v467
      %v549 = vpop.f32.mrf.mxu0
      %v550 = vadd.f32 0.0, %v549
      %v551 = vpop.f32.mrf.mxu0
      %v552 = vpop.f32.mrf.mxu0
      %v553 = vadd.f32 0.0, %v552
      %v554 = vpop.f32.mrf.mxu0
      %555 = vmatprep.mubr.bf16.mxu0 0
      %556 = vmatmul.mubr.bf16.gmra.mxu0 %v470
      %v557 = vpop.f32.mrf.mxu0
      %v558 = vadd.f32 0.0, %v557
      %v559 = vpop.f32.mrf.mxu0
      %v560 = vpop.f32.mrf.mxu0
      %v561 = vadd.f32 0.0, %v560
      %v562 = vpop.f32.mrf.mxu0
      %563 = vmatprep.mubr.bf16.mxu0 0
      %564 = vmatmul.mubr.bf16.gmra.mxu0 %v473
      %v565 = vpop.f32.mrf.mxu0
      %v566 = vadd.f32 0.0, %v565
      %v567 = vpop.f32.mrf.mxu0
      %v568 = vpop.f32.mrf.mxu0
      %v569 = vadd.f32 0.0, %v568
      %v570 = vpop.f32.mrf.mxu0
      %571 = vdwg.mxu0
      %vm572 = vcmask 31744
      %573 = vst.msk [vmem:[%s213] sm:$0xff] %vm572, %v510
      %574 = vst.msk [vmem:[%s213 + $0x8] sm:$0xff] %vm572, %v513
      %575 = vst.msk [vmem:[%s213 + $0x10] sm:$0xff] %vm572, %v518
      %576 = vst.msk [vmem:[%s213 + $0x18] sm:$0xff] %vm572, %v521
      %577 = vst.msk [vmem:[%s213 + $0x20] sm:$0xff] %vm572, %v526
      %578 = vst.msk [vmem:[%s213 + $0x28] sm:$0xff] %vm572, %v529
      %579 = vst.msk [vmem:[%s213 + $0x30] sm:$0xff] %vm572, %v534
      %580 = vst.msk [vmem:[%s213 + $0x38] sm:$0xff] %vm572, %v537
      %581 = vst.msk [vmem:[%s213 + $0x40] sm:$0xff] %vm572, %v542
      %582 = vst.msk [vmem:[%s213 + $0x48] sm:$0xff] %vm572, %v545
      %583 = vst.msk [vmem:[%s213 + $0x50] sm:$0xff] %vm572, %v550
      %584 = vst.msk [vmem:[%s213 + $0x58] sm:$0xff] %vm572, %v553
      %585 = vst.msk [vmem:[%s213 + $0x60] sm:$0xff] %vm572, %v558
      %586 = vst.msk [vmem:[%s213 + $0x68] sm:$0xff] %vm572, %v561
      %587 = vst.msk [vmem:[%s213 + $0x70] sm:$0xff] %vm572, %v566
      %588 = vst.msk [vmem:[%s213 + $0x78] sm:$0xff] %vm572, %v569
      %v597 = vunpack.c.l.b16 %v410
      %v598 = vunpack.c.h.b16 %v410
      %v599 = vunpack.c.l.b16 %v411
      %v600 = vunpack.c.h.b16 %v411
      %v601 = vunpack.c.l.b16 %v412
      %v602 = vunpack.c.h.b16 %v412
      %v603 = vunpack.c.l.b16 %v413
      %v604 = vunpack.c.h.b16 %v413
      %v605 = vunpack.c.l.b16 %v414
      %v606 = vunpack.c.h.b16 %v414
      %v607 = vunpack.c.l.b16 %v415
      %v608 = vunpack.c.h.b16 %v415
      %v609 = vunpack.c.l.b16 %v416
      %v610 = vunpack.c.h.b16 %v416
      %v611 = vunpack.c.l.b16 %v417
      %v612 = vunpack.c.h.b16 %v417
      %v613 = vpack.c.b16 %v597, %v597
      %v614 = vpack.c.b16 %v598, %v598
      %v615 = vpack.c.b16 %v599, %v599
      %v616 = vpack.c.b16 %v600, %v600
      %v617 = vpack.c.b16 %v601, %v601
      %v618 = vpack.c.b16 %v602, %v602
      %v619 = vpack.c.b16 %v603, %v603
      %v620 = vpack.c.b16 %v604, %v604
      %v621 = vpack.c.b16 %v605, %v605
      %v622 = vpack.c.b16 %v606, %v606
      %v623 = vpack.c.b16 %v607, %v607
      %v624 = vpack.c.b16 %v608, %v608
      %v625 = vpack.c.b16 %v609, %v609
      %v626 = vpack.c.b16 %v610, %v610
      %v627 = vpack.c.b16 %v611, %v611
      %v628 = vpack.c.b16 %v612, %v612
      %vm645 = vcmask 519168
      %646 = vst.msk [vmem:[%s207] sm:$0xf] %vm645, %v613
      %647 = vst.msk [vmem:[%s207 + $0x4] sm:$0xf] %vm645, %v614
      %648 = vst.msk [vmem:[%s207 + $0x8] sm:$0xf] %vm645, %v615
      %649 = vst.msk [vmem:[%s207 + $0xc] sm:$0xf] %vm645, %v616
      %650 = vst.msk [vmem:[%s207 + $0x10] sm:$0xf] %vm645, %v617
      %651 = vst.msk [vmem:[%s207 + $0x14] sm:$0xf] %vm645, %v618
      %652 = vst.msk [vmem:[%s207 + $0x18] sm:$0xf] %vm645, %v619
      %653 = vst.msk [vmem:[%s207 + $0x1c] sm:$0xf] %vm645, %v620
      %654 = vst.msk [vmem:[%s207 + $0x20] sm:$0xf] %vm645, %v621
      %655 = vst.msk [vmem:[%s207 + $0x24] sm:$0xf] %vm645, %v622
      %656 = vst.msk [vmem:[%s207 + $0x28] sm:$0xf] %vm645, %v623
      %657 = vst.msk [vmem:[%s207 + $0x2c] sm:$0xf] %vm645, %v624
      %658 = vst.msk [vmem:[%s207 + $0x30] sm:$0xf] %vm645, %v625
      %659 = vst.msk [vmem:[%s207 + $0x34] sm:$0xf] %vm645, %v626
      %660 = vst.msk [vmem:[%s207 + $0x38] sm:$0xf] %vm645, %v627
      %661 = vst.msk [vmem:[%s207 + $0x3c] sm:$0xf] %vm645, %v628
      %s662 = smul.u32 16, %s16
      %p663 = scmp.lt.s32.totalorder %s662, 31
      %s664 = scalar_select %p663, %s662, 31
      %s665 = smul.addr %s664, 4
      %s666 = scalar_lea.vmem %s3, %s665
      %s667 = smul.u32 16, %s16
      %p668 = scmp.lt.s32.totalorder %s667, 31
      %s669 = scalar_select %p668, %s667, 31
      %s670 = smul.addr %s669, 8
      %s671 = scalar_lea.vmem %s4, %s670
      // Predicated region
      $region33: #{tpu_custom_call.1} parent=31 // pred_check
        %p672 = pneg %p102
      $region34: #{tpu_custom_call.1} parent=31 // pred_check_branch
        %674 = sbr.rel (%p672) target = $region36
      $region35: #{tpu_custom_call.1} parent=31 // pred_region
        %s675 = smul.u32 16, %s16
      $region36: #{tpu_custom_call.1} parent=31 // pred_fallthru
        _
      // Predicated region
      $region37: #{tpu_custom_call.1} parent=31 // pred_check
        %p676 = pneg %p128
      $region38: #{tpu_custom_call.1} parent=31 // pred_check_branch
        %678 = sbr.rel (%p676) target = $region40
      $region39: #{tpu_custom_call.1} parent=31 // pred_region
        %s679 = smul.u32 16, %s16
      $region40: #{tpu_custom_call.1} parent=31 // pred_fallthru
        _
    $region32: #{tpu_custom_call.1} parent=5 // pred_fallthru
      _
    %p680 = scmp.le.s32.totalorder 2, %s11
    // Predicated region
    $region41: #{tpu_custom_call.1} parent=5 // pred_check
      %p681 = pneg %p680
    $region42: #{tpu_custom_call.1} parent=5 // pred_check_branch
      %683 = sbr.rel (%p681) target = $region44
    $region43: #{tpu_custom_call.1} parent=5 // pred_region
      %s684 = ssub.s32 %s11, 2
      // Predicated region
      $region45: #{tpu_custom_call.1} parent=43 // pred_check
        %p685 = pneg %p108
      $region46: #{tpu_custom_call.1} parent=43 // pred_check_branch
        %687 = sbr.rel (%p685) target = $region48
      $region47: #{tpu_custom_call.1} parent=43 // pred_region
        %s688 = smul.u32 16, %s17
        %p689 = scmp.lt.s32.totalorder %s688, 31
        %s690 = scalar_select %p689, %s688, 31
        %s691 = smul.addr %s690, 4
        %s692 = scalar_lea.vmem %s3, %s691
      $region48: #{tpu_custom_call.1} parent=43 // pred_fallthru
        _
      // Predicated region
      $region49: #{tpu_custom_call.1} parent=43 // pred_check
        %p693 = pneg %p134
      $region50: #{tpu_custom_call.1} parent=43 // pred_check_branch
        %695 = sbr.rel (%p693) target = $region52
      $region51: #{tpu_custom_call.1} parent=43 // pred_region
        %s696 = smul.u32 16, %s17
        %p697 = scmp.lt.s32.totalorder %s696, 31
        %s698 = scalar_select %p697, %s696, 31
        %s699 = smul.addr %s698, 8
        %s700 = scalar_lea.vmem %s4, %s699
      $region52: #{tpu_custom_call.1} parent=43 // pred_fallthru
        _
    $region44: #{tpu_custom_call.1} parent=5 // pred_fallthru
      _
  $region6: #{tpu_custom_call.1} parent=0 // loop_footer
    %s15 = sadd.s32 1, %s11
  $region7: #{tpu_custom_call.1} parent=0 // loop_footer_branch
    %10 = sbr.rel target = $region3
  $region8: #{tpu_custom_call.1} parent=0 // loop_exit
    _

</llo_original>
